<compile_context>
chip_gen: v6e
topology: v6e:2x2x1
jax: 0.10.0
libtpu: 0.0.40
codegen_flags: <defaults>
</compile_context>

<pallas_src>
import functools
import math

import jax
import jax.numpy as jnp
from jax.experimental import pallas as pl
from jax.experimental.pallas import tpu as pltpu


def _round_up(x, m):
    return ((x + m - 1) // m) * m


def _gap_kernel(x_ref, o_ref, acc_ref, *, inv_s, tile_s, s_total, mask_s):
    """Row-sum accumulate across the S grid axis; finalize with * (1/S)."""
    sj = pl.program_id(1)

    @pl.when(sj == 0)
    def _():
        acc_ref[...] = jnp.zeros_like(acc_ref)

    # f32 accumulation regardless of input dtype (bf16/fp8-safe).  The VPU
    # adds + one cross-lane reduce per row tile are free under the HBM stream.
    x = x_ref[...].astype(jnp.float32)
    if mask_s:
        # Only emitted when S is tiled and S % tile_s != 0: zero the
        # out-of-bounds lanes of the final (partial) S block.
        col = jax.lax.broadcasted_iota(jnp.int32, x.shape, dimension=1)
        x = jnp.where(col < (s_total - sj * tile_s), x, 0.0)
    acc_ref[...] += jnp.sum(x, axis=-1, keepdims=True)

    @pl.when(sj == pl.num_programs(1) - 1)
    def _():
        o_ref[...] = (acc_ref[...] * inv_s).astype(o_ref.dtype)


def _vmem_capacity_bytes():
    try:
        return int(pltpu.get_tpu_info().vmem_capacity_bytes)
    except Exception:
        return 64 * 1024 * 1024  # conservative fallback (v7x-sized)


def _choose_tiles(L, S, itemsize, block_budget_bytes=None):
    """Pick (tile_l, tile_s, vmem_limit) — generation-aware byte budget."""
    LANE = 128
    sub = 8 * max(1, 4 // itemsize)  # sublane multiple: 8 f32, 16 bf16, 32 int8

    vmem_cap = _vmem_capacity_bytes()
    # Per-input-block budget: ~20 MiB on 128 MiB parts (v5e/v6e), ~12.8 MiB on
    # 64 MiB parts (v7x).  x2 double-buffering stays comfortably inside VMEM.
    budget = block_budget_bytes or min(20 * 1024 * 1024, vmem_cap // 5)

    # Keep >= 2 blocks on the parallel L axis when L is big enough, so the
    # megacore (v7x) can shard rows across both TensorCores.
    half_l = max(_round_up(pl.cdiv(L, 2), sub), sub)

    row_bytes = max(S * itemsize, 1)
    tl_cap = (budget // row_bytes) // sub * sub

    if tl_cap >= sub:
        # Whole (unpadded) reduction axis fits one block; tile rows only.
        tile_s = S
        tile_l = min(_round_up(L, sub), tl_cap, 32 * 1024, half_l)
    else:
        # Very wide reduction axis: tile S as well; accumulator handles it.
        tile_l = min(_round_up(L, sub), 256, half_l)
        tile_s = max(LANE, min((budget // (tile_l * itemsize)) // LANE * LANE,
                               _round_up(S, LANE)))

    vmem_limit = int(min(vmem_cap - 4 * 1024 * 1024,
                         2 * budget + 8 * 1024 * 1024))
    return tile_l, tile_s, vmem_limit


def global_avg_pool(x, *, _block_budget_bytes=None):
    """Pallas equivalent of GlobalAvgPool.forward.

    x: (..., H, W) -> (...)   e.g. NCHW (N, C, H, W) -> (N, C).
    """
    lead_shape = x.shape[:-2]
    H, W = x.shape[-2], x.shape[-1]
    L = math.prod(lead_shape) if lead_shape else 1
    S = H * W
    itemsize = jnp.dtype(x.dtype).itemsize

    tile_l, tile_s, vmem_limit = _choose_tiles(L, S, itemsize,
                                               _block_budget_bytes)

    x2d = x.reshape(L, S)  # no padding: partial blocks handled by Pallas/mask
    grid = (pl.cdiv(L, tile_l), pl.cdiv(S, tile_s))
    mask_s = (tile_s < S) and (S % tile_s != 0)

    kernel = functools.partial(_gap_kernel, inv_s=1.0 / S, tile_s=tile_s,
                               s_total=S, mask_s=mask_s)

    out = pl.pallas_call(
        kernel,
        out_shape=jax.ShapeDtypeStruct((L, 1), x.dtype),
        grid_spec=pltpu.PrefetchScalarGridSpec(
            num_scalar_prefetch=0,
            grid=grid,
            in_specs=[pl.BlockSpec((tile_l, tile_s), lambda i, j: (i, j))],
            out_specs=pl.BlockSpec((tile_l, 1), lambda i, j: (i, 0)),
            scratch_shapes=[pltpu.VMEM((tile_l, 1), jnp.float32)],
        ),
        compiler_params=pltpu.CompilerParams(
            # Rows independent (megacore-shardable); reduction axis sequential.
            dimension_semantics=("parallel", "arbitrary"),
            vmem_limit_bytes=vmem_limit,
        ),
        cost_estimate=pl.CostEstimate(
            flops=L * S,
            transcendentals=0,
            bytes_accessed=L * S * itemsize + L * itemsize,
        ),
    )(x2d)

    return out[:, 0].reshape(lead_shape)


if __name__ == "__main__":
    key = jax.random.PRNGKey(0)

    # Small NCHW input consistent with the module's usage.
    x = jax.random.normal(key, (2, 4, 16, 16), dtype=jnp.float32)
    y = jax.block_until_ready(global_avg_pool(x))
    y_ref = x.reshape(*x.shape[:-2], -1).mean(-1)
    assert y.shape == (2, 4), y.shape
    assert jnp.allclose(y, y_ref, atol=1e-5, rtol=1e-5), \
        float(jnp.max(jnp.abs(y - y_ref)))

    # Ragged shape: L=15 (partial last row block), S=63 (non-128-multiple,
    # unpadded full-S block).
    x2 = jax.random.normal(jax.random.PRNGKey(1), (3, 5, 7, 9),
                           dtype=jnp.float32)
    y2 = jax.block_until_ready(global_avg_pool(x2))
    y2_ref = x2.reshape(*x2.shape[:-2], -1).mean(-1)
    assert y2.shape == (3, 5), y2.shape
    assert jnp.allclose(y2, y2_ref, atol=1e-5, rtol=1e-5), \
        float(jnp.max(jnp.abs(y2 - y2_ref)))

    # bf16 input: f32 accumulation inside the kernel, bf16 output.
    x3 = jax.random.normal(jax.random.PRNGKey(2), (2, 4, 16, 16),
                           dtype=jnp.bfloat16)
    y3 = jax.block_until_ready(global_avg_pool(x3))
    y3_ref = x3.astype(jnp.float32).reshape(2, 4, -1).mean(-1)
    assert y3.shape == (2, 4), y3.shape
    assert jnp.allclose(y3.astype(jnp.float32), y3_ref, atol=2e-2, rtol=2e-2)

    # Force the wide-S branch with a tiny budget to exercise the tiled-S
    # accumulator path + in-kernel iota masking of the ragged final S block.
    x4 = jax.random.normal(jax.random.PRNGKey(3), (2, 3, 20, 20),
                           dtype=jnp.float32)
    y4 = jax.block_until_ready(global_avg_pool(x4, _block_budget_bytes=8192))
    y4_ref = x4.reshape(*x4.shape[:-2], -1).mean(-1)
    assert y4.shape == (2, 3), y4.shape
    assert jnp.allclose(y4, y4_ref, atol=1e-5, rtol=1e-5), \
        float(jnp.max(jnp.abs(y4 - y4_ref)))

    print("KERNEL_OK")
</pallas_src>

<mosaic_0001>
module attributes {stable_mosaic.version = 11 : i64} {
  func.func @_gap_kernel(%arg0: i32, %arg1: i32, %arg2: memref<8x256xf32, #tpu.memory_space<vmem>>, %arg3: memref<8x1xf32, #tpu.memory_space<vmem>>, %arg4: memref<8x1xf32, #tpu.memory_space<vmem>>) attributes {dimension_semantics = [#tpu.dimension_semantics<parallel>, #tpu.dimension_semantics<arbitrary>], iteration_bounds = array<i64: 1, 1>, scalar_prefetch = 0 : i64, scratch_operands = 1 : i64, tpu.core_type = #tpu.core_type<tc>, window_params = [{transform_indices = @transform_0, window_bounds = array<i64: 8, 256>}, {transform_indices = @transform_1, window_bounds = array<i64: 8, 1>}]} {
    %c0_i32 = arith.constant 0 : i32
    %0 = arith.cmpi eq, %arg1, %c0_i32 : i32
    %1 = arith.extui %0 : i1 to i32
    %c0_i32_0 = arith.constant 0 : i32
    %2 = arith.cmpi ne, %1, %c0_i32_0 : i32
    scf.if %2 {
      %cst_8 = arith.constant 0.000000e+00 : f32
      %12 = vector.broadcast %cst_8 : f32 to vector<8x1xf32>
      %c0_9 = arith.constant 0 : index
      %c0_10 = arith.constant 0 : index
      %13 = vector.load %arg4[%c0_9, %c0_10] : memref<8x1xf32, #tpu.memory_space<vmem>>, vector<8x1xf32>
      tpu.vector_store %arg4[%c0_9, %c0_10], %12 {strides = array<i32>} : memref<8x1xf32, #tpu.memory_space<vmem>>, vector<8x1xf32>,
    } else {
    }
    %c0 = arith.constant 0 : index
    %c0_1 = arith.constant 0 : index
    %3 = vector.load %arg2[%c0, %c0_1] : memref<8x256xf32, #tpu.memory_space<vmem>>, vector<8x256xf32>
    %c0_2 = arith.constant 0 : index
    %c0_3 = arith.constant 0 : index
    %4 = vector.load %arg4[%c0_2, %c0_3] : memref<8x1xf32, #tpu.memory_space<vmem>>, vector<8x1xf32>
    %cst = arith.constant dense<0.000000e+00> : vector<8xf32>
    %5 = vector.multi_reduction <add>, %3, %cst [1] : vector<8x256xf32> to vector<8xf32>
    %6 = vector.shape_cast %5 : vector<8xf32> to vector<8x1xf32>
    %7 = arith.addf %4, %6 : vector<8x1xf32>
    %c0_4 = arith.constant 0 : index
    %c0_5 = arith.constant 0 : index
    %8 = vector.load %arg4[%c0_4, %c0_5] : memref<8x1xf32, #tpu.memory_space<vmem>>, vector<8x1xf32>
    tpu.vector_store %arg4[%c0_4, %c0_5], %7 {strides = array<i32>} : memref<8x1xf32, #tpu.memory_space<vmem>>, vector<8x1xf32>,
    %c0_i32_6 = arith.constant 0 : i32
    %9 = arith.cmpi eq, %arg1, %c0_i32_6 : i32
    %10 = arith.extui %9 : i1 to i32
    %c0_i32_7 = arith.constant 0 : i32
    %11 = arith.cmpi ne, %10, %c0_i32_7 : i32
    scf.if %11 {
      %c0_8 = arith.constant 0 : index
      %c0_9 = arith.constant 0 : index
      %12 = vector.load %arg4[%c0_8, %c0_9] : memref<8x1xf32, #tpu.memory_space<vmem>>, vector<8x1xf32>
      %cst_10 = arith.constant 3.906250e-03 : f32
      %13 = vector.broadcast %cst_10 : f32 to vector<8x1xf32>
      %14 = arith.mulf %12, %13 : vector<8x1xf32>
      %c0_11 = arith.constant 0 : index
      %c0_12 = arith.constant 0 : index
      %15 = vector.load %arg3[%c0_11, %c0_12] : memref<8x1xf32, #tpu.memory_space<vmem>>, vector<8x1xf32>
      tpu.vector_store %arg3[%c0_11, %c0_12], %14 {strides = array<i32>} : memref<8x1xf32, #tpu.memory_space<vmem>>, vector<8x1xf32>,
    } else {
    }
    return
  }
  func.func @transform_0(%arg0: i32, %arg1: i32) -> (i32, i32) {
    %c0_i32 = arith.constant 0 : i32
    return %arg0, %arg1 : i32, i32
  }
  func.func @transform_1(%arg0: i32, %arg1: i32) -> (i32, i32) {
    %c0_i32 = arith.constant 0 : i32
    %c0_i32_0 = arith.constant 0 : i32
    return %arg0, %c0_i32 : i32, i32
  }
}

</mosaic_0001>

<llo_original>
// kernel: tpu_custom_call.1
$region0: #{tpu_custom_call.1}
  #allocation0 [shape = 'u32[]', space=smem, size = 0x4, offset = 0x4, fixed_abs, tag = 'smem constant byte address 0x4 - core index']
  #allocation1 [shape = 'u32[144,128]{1,0:T(1,128)}', space=vmem, size = 0x12000, scoped, tag = 'internal scratch']
  #allocation2 [shape = 'f32[8,1]{1,0:T(8,128)}', space=vmem, size = 0x1000, scoped, tag = 'scratch operand']
  %s0 = inlined_call_operand.hbm [shape: f32[8,256], index: 0, kind: input, shape index: {}]
  %s1 = inlined_call_operand.vmem [shape: f32[8,1], index: 1, kind: output, shape index: {}]
  %s2 = sld [smem:[#allocation0]]
  $region26: #{tpu_custom_call.1} parent=0
    _
  %s4 = ssub.s32 1, %s2
  %s5 = scalar_select 0, %s4, %s2
  $region1: #{tpu_custom_call.1} parent=0
    #allocation3 [shape = 'u8[8192]{0}', space=vmem, size = 0x2000, scoped, tag = 'input window, operand 0, single buffered']
    #allocation4 [shape = 's32[1]{0}', space=sflag, size = 0x4, scoped, tag = 'scoped memory for tpu_custom_call.1']
    %6 = vsyncpa [#allocation4], 0
    // Predicated region
    $region2: #{tpu_custom_call.1} parent=1 // pred_check
      _
    $region3: #{tpu_custom_call.1} parent=1 // pred_check_branch
      %8 = sbr.rel (0) target = $region5
    $region4: #{tpu_custom_call.1} parent=1 // pred_region
      %s10 = ssub.s32 256, 256
      %11 = vsyncadd [#allocation4], %s10
      %s13 = sshll.u32 [#allocation3], 4
      %s14 = int_to_ptr.vmem [resolvable:$true] %s13
      %16 = dma.hbm_to_vmem [thread:$0]  %s0, 256, %s14, [#allocation4]
    $region5: #{tpu_custom_call.1} parent=1 // pred_fallthru
      _
    // Predicated region
    $region6: #{tpu_custom_call.1} parent=1 // pred_check
      _
    $region7: #{tpu_custom_call.1} parent=1 // pred_check_branch
      %18 = sbr.rel (0) target = $region9
    $region8: #{tpu_custom_call.1} parent=1 // pred_region
      %19 = dma.done [#allocation4], 256
    $region9: #{tpu_custom_call.1} parent=1 // pred_fallthru
      _
    %p20 = scmp.eq.s32.totalorder 0, 0
    // Predicated region
    $region10: #{tpu_custom_call.1} parent=1 // pred_check
      %p21 = pneg %p20
    $region11: #{tpu_custom_call.1} parent=1 // pred_check_branch
      %23 = sbr.rel (%p21) target = $region13
    $region12: #{tpu_custom_call.1} parent=1 // pred_region
      %vm24 = vcmask 7168
      %25 = vst.msk [vmem:[#allocation2] sm:$0xff] %vm24, 0.0
    $region13: #{tpu_custom_call.1} parent=1 // pred_fallthru
      _
    %v26 = vld [vmem:[#allocation3] sm:$0xff]
    %v27 = vld [vmem:[#allocation3 + $0x8] sm:$0xff]
    %v28 = vld [vmem:[#allocation2] sm:$0xff]
    %v29 = vadd.f32 %v26, %v27
    %30 = vadd.xlane.f32.xlu0 %v29
    %v31 = vpop.xlane.xlu0 %30
    %v32 = vadd.f32 %v28, %v31
    %vm33 = vcmask 7168
    %34 = vst.msk [vmem:[#allocation2] sm:$0xff] %vm33, %v32
    // Predicated region
    $region14: #{tpu_custom_call.1} parent=1 // pred_check
      %p35 = pneg %p20
    $region15: #{tpu_custom_call.1} parent=1 // pred_check_branch
      %37 = sbr.rel (%p35) target = $region17
    $region16: #{tpu_custom_call.1} parent=1 // pred_region
      %v38 = vld [vmem:[#allocation2] sm:$0xff]
      %v39 = vmul.f32 %v38, 0.00390625
      %40 = vst.msk [vmem:[%s1] sm:$0xff] %vm33, %v39
    $region17: #{tpu_custom_call.1} parent=1 // pred_fallthru
      _
    // Predicated region
    $region18: #{tpu_custom_call.1} parent=1 // pred_check
      _
    $region19: #{tpu_custom_call.1} parent=1 // pred_check_branch
      %42 = sbr.rel (0) target = $region21
    $region20: #{tpu_custom_call.1} parent=1 // pred_region
      _
    $region21: #{tpu_custom_call.1} parent=1 // pred_fallthru
      _
    // Predicated region
    $region22: #{tpu_custom_call.1} parent=1 // pred_check
      _
    $region23: #{tpu_custom_call.1} parent=1 // pred_check_branch
      %44 = sbr.rel (0) target = $region25
    $region24: #{tpu_custom_call.1} parent=1 // pred_region
      _
    $region25: #{tpu_custom_call.1} parent=1 // pred_fallthru
      _
    %45 = vsyncpa [#allocation4], 1

</llo_original>
